<compile_context>
chip_gen: v7x
topology: tpu7x:2x2x1
jax: 0.10.0
libtpu: 0.0.40
codegen_flags: <defaults>
</compile_context>

<pallas_src>
import functools

import jax
import jax.numpy as jnp
from jax.experimental import pallas as pl
from jax.experimental.pallas import tpu as pltpu

_LANE = 128          # vreg lane width (last dim)
_BF16_SUBLANE = 16   # bf16 packs 16 rows per vreg
_NEG_INF = -1e30


def _round_up(x, m):
    return ((x + m - 1) // m) * m


def _policy_kernel(x_ref, w1_ref, b1_ref, w2_ref, b2_ref, w3_ref, b3_ref, o_ref):
    # x arrives already in bf16 (cast fused with the pad in the wrapper).
    # All three matmuls run bf16 on the MXU with f32 accumulation; bias/ReLU/
    # softmax math stays in f32 on the VPU/EUP (v5e-safe).
    h1 = jnp.dot(x_ref[...], w1_ref[...],
                 preferred_element_type=jnp.float32) + b1_ref[...]
    h1 = jnp.maximum(h1, 0.0)

    h2 = jnp.dot(h1.astype(jnp.bfloat16), w2_ref[...],
                 preferred_element_type=jnp.float32) + b2_ref[...]
    h2 = jnp.maximum(h2, 0.0)

    logits = jnp.dot(h2.astype(jnp.bfloat16), w3_ref[...],
                     preferred_element_type=jnp.float32) + b3_ref[...]
    # Padded logit lanes carry a -1e30 bias -> exp() underflows to exactly 0,
    # so they drop out of the softmax normalization automatically.

    m = jnp.max(logits, axis=-1, keepdims=True)
    e = jnp.exp(logits - m)
    denom = jnp.sum(e, axis=-1, keepdims=True)
    o_ref[...] = (e * pl.reciprocal(denom, approx=True)).astype(o_ref.dtype)


def prepare_policy_params(params):
    """Pad/cast parameters for the kernel.

    - input feature dim padded only to a multiple of 16 (bf16 sublane pack),
      hidden/output dims padded to the 128-lane width,
    - weights cast to bf16 (MXU operands), biases kept f32,
    - padded logit lanes get a -1e30 bias so the in-kernel softmax ignores them.

    Returns (padded_params, (input_dim, hidden_dim, output_dim)).
    """
    w1, b1, w2, b2, w3, b3 = params
    input_dim, hidden_dim = w1.shape
    output_dim = w3.shape[1]

    in_p = _round_up(input_dim, _BF16_SUBLANE)
    hid_p = _round_up(hidden_dim, _LANE)
    out_p = _round_up(output_dim, _LANE)

    def pad2(a, rows, cols):
        return jnp.pad(a, ((0, rows - a.shape[0]), (0, cols - a.shape[1])))

    w1p = pad2(w1, in_p, hid_p).astype(jnp.bfloat16)
    w2p = pad2(w2, hid_p, hid_p).astype(jnp.bfloat16)
    w3p = pad2(w3, hid_p, out_p).astype(jnp.bfloat16)
    b1p = pad2(b1.reshape(1, -1), 1, hid_p).astype(jnp.float32)
    b2p = pad2(b2.reshape(1, -1), 1, hid_p).astype(jnp.float32)
    b3p = pad2(b3.reshape(1, -1), 1, out_p).astype(jnp.float32)
    b3p = b3p.at[:, output_dim:].set(_NEG_INF)

    return (w1p, b1p, w2p, b2p, w3p, b3p), (input_dim, hidden_dim, output_dim)


@functools.partial(jax.jit, static_argnames=("dims",))
def policy_forward(state, padded_params, dims):
    """state: (B, input_dim) f32 -> (B, output_dim) f32 action probabilities."""
    w1, b1, w2, b2, w3, b3 = padded_params
    input_dim, _, output_dim = dims
    in_p, hid_p = w1.shape
    out_p = w3.shape[1]

    batch = state.shape[0]
    # Large batch tiles amortize the ~0.35 us per-step pipeline overhead; the
    # ceil(batch/2) cap keeps the grid at >= 2 steps whenever the batch allows
    # it so v7x's second TensorCore is actually used ("parallel" axis).
    half = _round_up(pl.cdiv(batch, 2), _BF16_SUBLANE)
    tile_b = max(_BF16_SUBLANE, min(2048, half))
    b_pad = _round_up(batch, tile_b)
    grid = (b_pad // tile_b,)

    # Pad batch + feature dims and cast to bf16 in one wrapper op: the streamed
    # activation DMA is half the bytes and the in-kernel cast disappears.
    x = jnp.pad(state, ((0, b_pad - batch), (0, in_p - input_dim))).astype(jnp.bfloat16)

    # VMEM budget: double-buffered streamed tiles + single-buffered resident
    # weights/biases, with ~2x headroom for compiler scratch.
    stream_bytes = 2 * (tile_b * in_p * 2 + tile_b * out_p * 2)
    resident_bytes = (w1.size + w2.size + w3.size) * 2 + (b1.size + b2.size + b3.size) * 4
    vmem_limit = int(max(32 * 1024 * 1024,
                         min(64 * 1024 * 1024, 2 * (stream_bytes + resident_bytes))))

    flops = 2 * b_pad * (in_p * hid_p + hid_p * hid_p + hid_p * out_p)
    bytes_accessed = (x.size * 2 + b_pad * out_p * 2          # bf16 activations/output
                      + (w1.size + w2.size + w3.size) * 2     # bf16 weights
                      + (b1.size + b2.size + b3.size) * 4)    # f32 biases
    cost = pl.CostEstimate(flops=flops,
                           transcendentals=b_pad * out_p,
                           bytes_accessed=bytes_accessed)

    # Weights/biases have constant index_maps -> keep them single-buffered.
    resident = functools.partial(pl.BlockSpec, pipeline_mode=pl.Buffered(1))

    out = pl.pallas_call(
        _policy_kernel,
        out_shape=jax.ShapeDtypeStruct((b_pad, out_p), jnp.bfloat16),
        grid=grid,
        in_specs=[
            pl.BlockSpec((tile_b, in_p), lambda i: (i, 0)),   # activations stream (bf16)
            resident((in_p, hid_p), lambda i: (0, 0)),        # resident weights/biases
            resident((1, hid_p), lambda i: (0, 0)),
            resident((hid_p, hid_p), lambda i: (0, 0)),
            resident((1, hid_p), lambda i: (0, 0)),
            resident((hid_p, out_p), lambda i: (0, 0)),
            resident((1, out_p), lambda i: (0, 0)),
        ],
        out_specs=pl.BlockSpec((tile_b, out_p), lambda i: (i, 0)),
        compiler_params=pltpu.CompilerParams(
            dimension_semantics=("parallel",),
            vmem_limit_bytes=vmem_limit),
        cost_estimate=cost,
    )(x, w1, b1, w2, b2, w3, b3)

    # Strip batch/lane padding, restore f32, and renormalize exactly over the
    # real action lanes (removes approx-reciprocal / bf16 store rounding from
    # the row sums so downstream sampling/log-probs see an exact simplex).
    probs = out[:batch, :output_dim].astype(jnp.float32)
    return probs / jnp.sum(probs, axis=-1, keepdims=True)


def init_policy_params(key, input_dim, hidden_dim, output_dim):
    """Deterministic torch.nn.Linear-style init: U(-1/sqrt(fan_in), 1/sqrt(fan_in))."""
    def linear(k, fan_in, fan_out):
        kw, kb = jax.random.split(k)
        bound = 1.0 / jnp.sqrt(jnp.float32(fan_in))
        w = jax.random.uniform(kw, (fan_in, fan_out), jnp.float32, -bound, bound)
        b = jax.random.uniform(kb, (1, fan_out), jnp.float32, -bound, bound)
        return w, b

    k1, k2, k3 = jax.random.split(key, 3)
    w1, b1 = linear(k1, input_dim, hidden_dim)
    w2, b2 = linear(k2, hidden_dim, hidden_dim)
    w3, b3 = linear(k3, hidden_dim, output_dim)
    return (w1, b1, w2, b2, w3, b3)


def _reference_forward(state, params):
    w1, b1, w2, b2, w3, b3 = params
    h1 = jnp.maximum(state @ w1 + b1, 0.0)
    h2 = jnp.maximum(h1 @ w2 + b2, 0.0)
    return jax.nn.softmax(h2 @ w3 + b3, axis=-1)


if __name__ == "__main__":
    key = jax.random.PRNGKey(0)
    k_params, k_state = jax.random.split(key)

    batch, input_dim, hidden_dim, output_dim = 8, 16, 32, 4

    params = init_policy_params(k_params, input_dim, hidden_dim, output_dim)
    state = jax.random.normal(k_state, (batch, input_dim), jnp.float32)

    padded_params, dims = prepare_policy_params(params)
    probs = policy_forward(state, padded_params, dims)
    probs = jax.block_until_ready(probs)

    # Sanity checks (tolerances account for bf16 matmuls/output).
    assert probs.shape == (batch, output_dim)
    assert bool(jnp.all(jnp.isfinite(probs)))
    assert jnp.allclose(jnp.sum(probs, axis=-1), 1.0, atol=1e-5)
    ref = _reference_forward(state, params)
    assert jnp.allclose(probs, ref, atol=5e-2)

    print("KERNEL_OK")
</pallas_src>

<mosaic_0001>
module attributes {stable_mosaic.version = 11 : i64} {
  func.func @_policy_kernel(%arg0: i32, %arg1: memref<16x16xbf16, #tpu.memory_space<vmem>>, %arg2: memref<16x128xbf16, #tpu.memory_space<vmem>>, %arg3: memref<1x128xf32, #tpu.memory_space<vmem>>, %arg4: memref<128x128xbf16, #tpu.memory_space<vmem>>, %arg5: memref<1x128xf32, #tpu.memory_space<vmem>>, %arg6: memref<128x128xbf16, #tpu.memory_space<vmem>>, %arg7: memref<1x128xf32, #tpu.memory_space<vmem>>, %arg8: memref<16x128xbf16, #tpu.memory_space<vmem>>) attributes {dimension_semantics = [#tpu.dimension_semantics<parallel>], iteration_bounds = array<i64: 1>, scalar_prefetch = 0 : i64, scratch_operands = 0 : i64, tpu.core_type = #tpu.core_type<tc>, window_params = [{transform_indices = @transform_0, window_bounds = array<i64: 16, 16>}, {pipeline_mode = #tpu.pipeline_mode<synchronous>, transform_indices = @transform_1, window_bounds = array<i64: 16, 128>}, {pipeline_mode = #tpu.pipeline_mode<synchronous>, transform_indices = @transform_2, window_bounds = array<i64: 1, 128>}, {pipeline_mode = #tpu.pipeline_mode<synchronous>, transform_indices = @transform_3, window_bounds = array<i64: 128, 128>}, {pipeline_mode = #tpu.pipeline_mode<synchronous>, transform_indices = @transform_4, window_bounds = array<i64: 1, 128>}, {pipeline_mode = #tpu.pipeline_mode<synchronous>, transform_indices = @transform_5, window_bounds = array<i64: 128, 128>}, {pipeline_mode = #tpu.pipeline_mode<synchronous>, transform_indices = @transform_6, window_bounds = array<i64: 1, 128>}, {transform_indices = @transform_7, window_bounds = array<i64: 16, 128>}]} {
    %c0 = arith.constant 0 : index
    %c0_0 = arith.constant 0 : index
    %0 = vector.load %arg1[%c0, %c0_0] : memref<16x16xbf16, #tpu.memory_space<vmem>>, vector<16x16xbf16>
    %c0_1 = arith.constant 0 : index
    %c0_2 = arith.constant 0 : index
    %1 = vector.load %arg2[%c0_1, %c0_2] : memref<16x128xbf16, #tpu.memory_space<vmem>>, vector<16x128xbf16>
    %cst = arith.constant dense<0.000000e+00> : vector<16x128xf32>
    %2 = tpu.matmul %0, %1, %cst {dimension_numbers = #tpu.dot_dimension_numbers<[1], [0], [0], [1], [0, 0, 1, 1], [], []>} : vector<16x16xbf16>, vector<16x128xbf16>, vector<16x128xf32> -> vector<16x128xf32>
    %c0_3 = arith.constant 0 : index
    %c0_4 = arith.constant 0 : index
    %3 = vector.load %arg3[%c0_3, %c0_4] : memref<1x128xf32, #tpu.memory_space<vmem>>, vector<1x128xf32>
    %4 = vector.broadcast %3 : vector<1x128xf32> to vector<16x128xf32>
    %5 = arith.addf %2, %4 : vector<16x128xf32>
    %cst_5 = arith.constant 0.000000e+00 : f32
    %6 = vector.broadcast %cst_5 : f32 to vector<16x128xf32>
    %7 = arith.maximumf %5, %6 : vector<16x128xf32>
    %8 = arith.truncf %7 : vector<16x128xf32> to vector<16x128xbf16>
    %c0_6 = arith.constant 0 : index
    %c0_7 = arith.constant 0 : index
    %9 = vector.load %arg4[%c0_6, %c0_7] : memref<128x128xbf16, #tpu.memory_space<vmem>>, vector<128x128xbf16>
    %cst_8 = arith.constant dense<0.000000e+00> : vector<16x128xf32>
    %10 = tpu.matmul %8, %9, %cst_8 {dimension_numbers = #tpu.dot_dimension_numbers<[1], [0], [0], [1], [0, 0, 1, 1], [], []>} : vector<16x128xbf16>, vector<128x128xbf16>, vector<16x128xf32> -> vector<16x128xf32>
    %c0_9 = arith.constant 0 : index
    %c0_10 = arith.constant 0 : index
    %11 = vector.load %arg5[%c0_9, %c0_10] : memref<1x128xf32, #tpu.memory_space<vmem>>, vector<1x128xf32>
    %12 = vector.broadcast %11 : vector<1x128xf32> to vector<16x128xf32>
    %13 = arith.addf %10, %12 : vector<16x128xf32>
    %cst_11 = arith.constant 0.000000e+00 : f32
    %14 = vector.broadcast %cst_11 : f32 to vector<16x128xf32>
    %15 = arith.maximumf %13, %14 : vector<16x128xf32>
    %16 = arith.truncf %15 : vector<16x128xf32> to vector<16x128xbf16>
    %c0_12 = arith.constant 0 : index
    %c0_13 = arith.constant 0 : index
    %17 = vector.load %arg6[%c0_12, %c0_13] : memref<128x128xbf16, #tpu.memory_space<vmem>>, vector<128x128xbf16>
    %cst_14 = arith.constant dense<0.000000e+00> : vector<16x128xf32>
    %18 = tpu.matmul %16, %17, %cst_14 {dimension_numbers = #tpu.dot_dimension_numbers<[1], [0], [0], [1], [0, 0, 1, 1], [], []>} : vector<16x128xbf16>, vector<128x128xbf16>, vector<16x128xf32> -> vector<16x128xf32>
    %c0_15 = arith.constant 0 : index
    %c0_16 = arith.constant 0 : index
    %19 = vector.load %arg7[%c0_15, %c0_16] : memref<1x128xf32, #tpu.memory_space<vmem>>, vector<1x128xf32>
    %20 = vector.broadcast %19 : vector<1x128xf32> to vector<16x128xf32>
    %21 = arith.addf %18, %20 : vector<16x128xf32>
    %cst_17 = arith.constant dense<0xFF800000> : vector<16xf32>
    %22 = vector.multi_reduction <maximumf>, %21, %cst_17 [1] : vector<16x128xf32> to vector<16xf32>
    %23 = vector.shape_cast %22 : vector<16xf32> to vector<16x1xf32>
    %24 = vector.broadcast %23 : vector<16x1xf32> to vector<16x128xf32>
    %25 = arith.subf %21, %24 : vector<16x128xf32>
    %26 = math.exp %25 : vector<16x128xf32>
    %cst_18 = arith.constant dense<0.000000e+00> : vector<16xf32>
    %27 = vector.multi_reduction <add>, %26, %cst_18 [1] : vector<16x128xf32> to vector<16xf32>
    %28 = vector.shape_cast %27 : vector<16xf32> to vector<16x1xf32>
    %29 = tpu.reciprocal %28 {approx = true} : vector<16x1xf32> -> vector<16x1xf32>
    %30 = vector.broadcast %29 : vector<16x1xf32> to vector<16x128xf32>
    %31 = arith.mulf %26, %30 : vector<16x128xf32>
    %32 = arith.truncf %31 : vector<16x128xf32> to vector<16x128xbf16>
    %c0_19 = arith.constant 0 : index
    %c0_20 = arith.constant 0 : index
    %33 = vector.load %arg8[%c0_19, %c0_20] : memref<16x128xbf16, #tpu.memory_space<vmem>>, vector<16x128xbf16>
    tpu.vector_store %arg8[%c0_19, %c0_20], %32 {strides = array<i32>} : memref<16x128xbf16, #tpu.memory_space<vmem>>, vector<16x128xbf16>,
    return
  }
  func.func @transform_0(%arg0: i32) -> (i32, i32) {
    %c0_i32 = arith.constant 0 : i32
    %c0_i32_0 = arith.constant 0 : i32
    return %arg0, %c0_i32 : i32, i32
  }
  func.func @transform_1(%arg0: i32) -> (i32, i32) {
    %c0_i32 = arith.constant 0 : i32
    %c0_i32_0 = arith.constant 0 : i32
    %c0_i32_1 = arith.constant 0 : i32
    return %c0_i32, %c0_i32_0 : i32, i32
  }
  func.func @transform_2(%arg0: i32) -> (i32, i32) {
    %c0_i32 = arith.constant 0 : i32
    %c0_i32_0 = arith.constant 0 : i32
    %c0_i32_1 = arith.constant 0 : i32
    return %c0_i32, %c0_i32_0 : i32, i32
  }
  func.func @transform_3(%arg0: i32) -> (i32, i32) {
    %c0_i32 = arith.constant 0 : i32
    %c0_i32_0 = arith.constant 0 : i32
    %c0_i32_1 = arith.constant 0 : i32
    return %c0_i32, %c0_i32_0 : i32, i32
  }
  func.func @transform_4(%arg0: i32) -> (i32, i32) {
    %c0_i32 = arith.constant 0 : i32
    %c0_i32_0 = arith.constant 0 : i32
    %c0_i32_1 = arith.constant 0 : i32
    return %c0_i32, %c0_i32_0 : i32, i32
  }
  func.func @transform_5(%arg0: i32) -> (i32, i32) {
    %c0_i32 = arith.constant 0 : i32
    %c0_i32_0 = arith.constant 0 : i32
    %c0_i32_1 = arith.constant 0 : i32
    return %c0_i32, %c0_i32_0 : i32, i32
  }
  func.func @transform_6(%arg0: i32) -> (i32, i32) {
    %c0_i32 = arith.constant 0 : i32
    %c0_i32_0 = arith.constant 0 : i32
    %c0_i32_1 = arith.constant 0 : i32
    return %c0_i32, %c0_i32_0 : i32, i32
  }
  func.func @transform_7(%arg0: i32) -> (i32, i32) {
    %c0_i32 = arith.constant 0 : i32
    %c0_i32_0 = arith.constant 0 : i32
    return %arg0, %c0_i32 : i32, i32
  }
}

</mosaic_0001>

<llo_original>
// kernel: policy_forward.1
$region0: #{policy_forward.1}
  #allocation0 [shape = 'u32[]', space=smem, size = 0x4, offset = 0x4, fixed_abs, tag = 'smem constant byte address 0x4 - core index']
  #allocation1 [shape = 'u32[144,128]{1,0:T(1,128)}', space=vmem, size = 0x12000, scoped, tag = 'internal scratch']
  %s0 = inlined_call_operand.vmem [shape: bf16[16,16], index: 0, kind: input, shape index: {}]
  %s1 = inlined_call_operand.vmem [shape: bf16[16,128], index: 1, kind: input, shape index: {}]
  %s2 = inlined_call_operand.vmem [shape: f32[1,128], index: 2, kind: input, shape index: {}]
  %s3 = inlined_call_operand.hbm [shape: bf16[128,128], index: 3, kind: input, shape index: {}]
  %s4 = inlined_call_operand.vmem [shape: f32[1,128], index: 4, kind: input, shape index: {}]
  %s5 = inlined_call_operand.hbm [shape: bf16[128,128], index: 5, kind: input, shape index: {}]
  %s6 = inlined_call_operand.vmem [shape: f32[1,128], index: 6, kind: input, shape index: {}]
  %s7 = inlined_call_operand.vmem [shape: bf16[16,128], index: 7, kind: output, shape index: {}]
  %s8 = sld [smem:[#allocation0]]
  $region46: #{policy_forward.1} parent=0
    _
  %s10 = ssub.s32 1, %s8
  %s11 = scalar_select 0, %s10, %s8
  $region1: #{policy_forward.1} parent=0
    #allocation2 [shape = 'u8[32768]{0}', space=vmem, size = 0x8000, scoped, tag = 'input window, operand 3, single buffered']
    #allocation3 [shape = 's32[1]{0}', space=sflag, size = 0x4, scoped, tag = 'scoped memory for policy_forward.1']
    #allocation4 [shape = 'u8[32768]{0}', space=vmem, size = 0x8000, scoped, tag = 'input window, operand 5, single buffered']
    #allocation5 [shape = 's32[1]{0}', space=sflag, size = 0x4, scoped, tag = 'scoped memory for policy_forward.1']
    %12 = vsyncpa [#allocation3], 0
    %13 = vsyncpa [#allocation5], 0
    // Predicated region
    $region2: #{policy_forward.1} parent=1 // pred_check
      _
    $region3: #{policy_forward.1} parent=1 // pred_check_branch
      %15 = sbr.rel (0) target = $region5
    $region4: #{policy_forward.1} parent=1 // pred_region
      _
    $region5: #{policy_forward.1} parent=1 // pred_fallthru
      _
    // Predicated region
    $region6: #{policy_forward.1} parent=1 // pred_check
      _
    $region7: #{policy_forward.1} parent=1 // pred_check_branch
      %17 = sbr.rel (0) target = $region9
    $region8: #{policy_forward.1} parent=1 // pred_region
      _
    $region9: #{policy_forward.1} parent=1 // pred_fallthru
      _
    // Predicated region
    $region10: #{policy_forward.1} parent=1 // pred_check
      _
    $region11: #{policy_forward.1} parent=1 // pred_check_branch
      %19 = sbr.rel (0) target = $region13
    $region12: #{policy_forward.1} parent=1 // pred_region
      _
    $region13: #{policy_forward.1} parent=1 // pred_fallthru
      _
    // Predicated region
    $region14: #{policy_forward.1} parent=1 // pred_check
      _
    $region15: #{policy_forward.1} parent=1 // pred_check_branch
      %21 = sbr.rel (0) target = $region17
    $region16: #{policy_forward.1} parent=1 // pred_region
      %s23 = ssub.s32 1024, 1024
      %24 = vsyncadd [#allocation3], %s23
      %s25 = sshll.u32 [#allocation2], 4
      %s26 = int_to_ptr.vmem [resolvable:$true] %s25
      %31 = dma.hbm_to_vmem [thread:$0]  %s3, 1024, %s26, [#allocation3], 64, 64, 4
    $region17: #{policy_forward.1} parent=1 // pred_fallthru
      _
    // Predicated region
    $region18: #{policy_forward.1} parent=1 // pred_check
      _
    $region19: #{policy_forward.1} parent=1 // pred_check_branch
      %33 = sbr.rel (0) target = $region21
    $region20: #{policy_forward.1} parent=1 // pred_region
      _
    $region21: #{policy_forward.1} parent=1 // pred_fallthru
      _
    // Predicated region
    $region22: #{policy_forward.1} parent=1 // pred_check
      _
    $region23: #{policy_forward.1} parent=1 // pred_check_branch
      %35 = sbr.rel (0) target = $region25
    $region24: #{policy_forward.1} parent=1 // pred_region
      %s37 = ssub.s32 1024, 1024
      %38 = vsyncadd [#allocation5], %s37
      %s39 = sshll.u32 [#allocation4], 4
      %s40 = int_to_ptr.vmem [resolvable:$true] %s39
      %45 = dma.hbm_to_vmem [thread:$0]  %s5, 1024, %s40, [#allocation5], 64, 64, 4
    $region25: #{policy_forward.1} parent=1 // pred_fallthru
      _
    // Predicated region
    $region26: #{policy_forward.1} parent=1 // pred_check
      _
    $region27: #{policy_forward.1} parent=1 // pred_check_branch
      %47 = sbr.rel (0) target = $region29
    $region28: #{policy_forward.1} parent=1 // pred_region
      _
    $region29: #{policy_forward.1} parent=1 // pred_fallthru
      _
    // Predicated region
    $region30: #{policy_forward.1} parent=1 // pred_check
      _
    $region31: #{policy_forward.1} parent=1 // pred_check_branch
      %49 = sbr.rel (0) target = $region33
    $region32: #{policy_forward.1} parent=1 // pred_region
      %50 = dma.done [#allocation3], 1024
    $region33: #{policy_forward.1} parent=1 // pred_fallthru
      _
    // Predicated region
    $region34: #{policy_forward.1} parent=1 // pred_check
      _
    $region35: #{policy_forward.1} parent=1 // pred_check_branch
      %52 = sbr.rel (0) target = $region37
    $region36: #{policy_forward.1} parent=1 // pred_region
      %53 = dma.done [#allocation5], 1024
    $region37: #{policy_forward.1} parent=1 // pred_fallthru
      _
    %v55 = vld [vmem:[%s0] sm:$0xf]
    %v56 = vld [vmem:[%s0 + $0x4] sm:$0xf]
    %v57 = vld [vmem:[%s1] sm:$0xf]
    %v58 = vld [vmem:[%s1 + $0x4] sm:$0xf]
    %v59 = vld [vmem:[%s2] sm:$0x1]
    %v61 = vlaneseq
    %v62 = vshrl.u32 %v61, 7
    %v63 = vsub.s32 0, %v62
    %v64 = vrot.slane %v59, %v63
    %v68 = vunpack.c.l.b16 %v55
    %v69 = vunpack.c.l.b16 %v56
    %v70 = vpack.c.b16 %v69, %v68
    %v73 = vunpack.c.l.b16 %v57
    %v74 = vunpack.c.l.b16 %v58
    %v75 = vpack.c.b16 %v74, %v73
    %vm77 = vcmask 130048
    %v79 = vsel %vm77, %v70, 0
    %81 = vmatprep.subr.bf16.mxu0 0
    %82 = vmatpush1.bf16.msra.mxu0 %v75
    %83 = vmatprep.subr.bf16.mxu0 0
    %84 = vmatpush1.bf16.msra.mxu0 0
    %85 = vmatprep.subr.bf16.mxu0 0
    %86 = vmatpush1.bf16.msra.mxu0 0
    %87 = vmatprep.subr.bf16.mxu0 0
    %88 = vmatpush1.bf16.msra.mxu0 0
    %89 = vmatprep.subr.bf16.mxu0 0
    %90 = vmatpush1.bf16.msra.mxu0 0
    %91 = vmatprep.subr.bf16.mxu0 0
    %92 = vmatpush1.bf16.msra.mxu0 0
    %93 = vmatprep.subr.bf16.mxu0 0
    %94 = vmatpush1.bf16.msra.mxu0 0
    %95 = vmatprep.subr.bf16.mxu0 0
    %96 = vmatpush1.bf16.msra.mxu0 0
    %97 = vmatprep.subr.bf16.mxu0 0
    %98 = vmatpush1.bf16.msra.mxu0 0
    %99 = vmatprep.subr.bf16.mxu0 0
    %100 = vmatpush1.bf16.msra.mxu0 0
    %101 = vmatprep.subr.bf16.mxu0 0
    %102 = vmatpush1.bf16.msra.mxu0 0
    %103 = vmatprep.subr.bf16.mxu0 0
    %104 = vmatpush1.bf16.msra.mxu0 0
    %105 = vmatprep.subr.bf16.mxu0 0
    %106 = vmatpush1.bf16.msra.mxu0 0
    %107 = vmatprep.subr.bf16.mxu0 0
    %108 = vmatpush1.bf16.msra.mxu0 0
    %109 = vmatprep.subr.bf16.mxu0 0
    %110 = vmatpush1.bf16.msra.mxu0 0
    %111 = vmatprep.subr.bf16.mxu0 0
    %112 = vmatpush1.bf16.msra.mxu0 0
    %113 = vmatprep.mubr.bf16.mxu0 0
    %114 = vmatmul.mubr.bf16.gmra.mrb[0].mxu0 %v79
    %v115 = vpop.f32.mrb[0].mxu0
    %v116 = vadd.f32 %v64, %v115
    %v117 = vpop.f32.mrb[0].mxu0
    %v118 = vpop.f32.mrb[0].mxu0
    %v119 = vadd.f32 %v64, %v118
    %v120 = vpop.f32.mrb[0].mxu0
    %121 = vdwg.mxu0
    %v122 = vmax.f32 %v116, 0.0
    %v123 = vmax.f32 %v119, 0.0
    %v124 = vpack.c.bf16 %v123, %v122
    %v125 = vld [vmem:[#allocation2] sm:$0xf]
    %v126 = vld [vmem:[#allocation2 + $0x4] sm:$0xf]
    %v127 = vld [vmem:[#allocation2 + $0x8] sm:$0xf]
    %v128 = vld [vmem:[#allocation2 + $0xc] sm:$0xf]
    %v129 = vld [vmem:[#allocation2 + $0x10] sm:$0xf]
    %v130 = vld [vmem:[#allocation2 + $0x14] sm:$0xf]
    %v131 = vld [vmem:[#allocation2 + $0x18] sm:$0xf]
    %v132 = vld [vmem:[#allocation2 + $0x1c] sm:$0xf]
    %v133 = vld [vmem:[#allocation2 + $0x20] sm:$0xf]
    %v134 = vld [vmem:[#allocation2 + $0x24] sm:$0xf]
    %v135 = vld [vmem:[#allocation2 + $0x28] sm:$0xf]
    %v136 = vld [vmem:[#allocation2 + $0x2c] sm:$0xf]
    %v137 = vld [vmem:[#allocation2 + $0x30] sm:$0xf]
    %v138 = vld [vmem:[#allocation2 + $0x34] sm:$0xf]
    %v139 = vld [vmem:[#allocation2 + $0x38] sm:$0xf]
    %v140 = vld [vmem:[#allocation2 + $0x3c] sm:$0xf]
    %v141 = vld [vmem:[%s4] sm:$0x1]
    %v143 = vlaneseq
    %v144 = vshrl.u32 %v143, 7
    %v145 = vsub.s32 0, %v144
    %v146 = vrot.slane %v141, %v145
    %v164 = vunpack.c.l.b16 %v125
    %v165 = vunpack.c.l.b16 %v126
    %v166 = vunpack.c.l.b16 %v127
    %v167 = vunpack.c.l.b16 %v128
    %v168 = vunpack.c.l.b16 %v129
    %v169 = vunpack.c.l.b16 %v130
    %v170 = vunpack.c.l.b16 %v131
    %v171 = vunpack.c.l.b16 %v132
    %v172 = vunpack.c.l.b16 %v133
    %v173 = vunpack.c.l.b16 %v134
    %v174 = vunpack.c.l.b16 %v135
    %v175 = vunpack.c.l.b16 %v136
    %v176 = vunpack.c.l.b16 %v137
    %v177 = vunpack.c.l.b16 %v138
    %v178 = vunpack.c.l.b16 %v139
    %v179 = vunpack.c.l.b16 %v140
    %v180 = vpack.c.b16 %v165, %v164
    %v181 = vpack.c.b16 %v167, %v166
    %v182 = vpack.c.b16 %v169, %v168
    %v183 = vpack.c.b16 %v171, %v170
    %v184 = vpack.c.b16 %v173, %v172
    %v185 = vpack.c.b16 %v175, %v174
    %v186 = vpack.c.b16 %v177, %v176
    %v187 = vpack.c.b16 %v179, %v178
    %196 = vmatprep.subr.bf16.mxu0 0
    %197 = vmatpush1.bf16.msra.mxu0 %v180
    %198 = vmatprep.subr.bf16.mxu0 0
    %199 = vmatpush1.bf16.msra.mxu0 %v181
    %200 = vmatprep.subr.bf16.mxu0 0
    %201 = vmatpush1.bf16.msra.mxu0 %v182
    %202 = vmatprep.subr.bf16.mxu0 0
    %203 = vmatpush1.bf16.msra.mxu0 %v183
    %204 = vmatprep.subr.bf16.mxu0 0
    %205 = vmatpush1.bf16.msra.mxu0 %v184
    %206 = vmatprep.subr.bf16.mxu0 0
    %207 = vmatpush1.bf16.msra.mxu0 %v185
    %208 = vmatprep.subr.bf16.mxu0 0
    %209 = vmatpush1.bf16.msra.mxu0 %v186
    %210 = vmatprep.subr.bf16.mxu0 0
    %211 = vmatpush1.bf16.msra.mxu0 %v187
    %212 = vmatprep.subr.bf16.mxu0 0
    %213 = vmatpush1.bf16.msra.mxu0 0
    %214 = vmatprep.subr.bf16.mxu0 0
    %215 = vmatpush1.bf16.msra.mxu0 0
    %216 = vmatprep.subr.bf16.mxu0 0
    %217 = vmatpush1.bf16.msra.mxu0 0
    %218 = vmatprep.subr.bf16.mxu0 0
    %219 = vmatpush1.bf16.msra.mxu0 0
    %220 = vmatprep.subr.bf16.mxu0 0
    %221 = vmatpush1.bf16.msra.mxu0 0
    %222 = vmatprep.subr.bf16.mxu0 0
    %223 = vmatpush1.bf16.msra.mxu0 0
    %224 = vmatprep.subr.bf16.mxu0 0
    %225 = vmatpush1.bf16.msra.mxu0 0
    %226 = vmatprep.subr.bf16.mxu0 0
    %227 = vmatpush1.bf16.msra.mxu0 0
    %228 = vmatprep.mubr.bf16.mxu0 0
    %229 = vmatmul.mubr.bf16.gmra.mrb[0].mxu0 %v124
    %v230 = vpop.f32.mrb[0].mxu0
    %v231 = vadd.f32 %v146, %v230
    %v232 = vpop.f32.mrb[0].mxu0
    %v233 = vpop.f32.mrb[0].mxu0
    %v234 = vadd.f32 %v146, %v233
    %v235 = vpop.f32.mrb[0].mxu0
    %236 = vdwg.mxu0
    %v237 = vmax.f32 %v231, 0.0
    %v238 = vmax.f32 %v234, 0.0
    %v239 = vpack.c.bf16 %v238, %v237
    %v240 = vld [vmem:[#allocation4] sm:$0xf]
    %v241 = vld [vmem:[#allocation4 + $0x4] sm:$0xf]
    %v242 = vld [vmem:[#allocation4 + $0x8] sm:$0xf]
    %v243 = vld [vmem:[#allocation4 + $0xc] sm:$0xf]
    %v244 = vld [vmem:[#allocation4 + $0x10] sm:$0xf]
    %v245 = vld [vmem:[#allocation4 + $0x14] sm:$0xf]
    %v246 = vld [vmem:[#allocation4 + $0x18] sm:$0xf]
    %v247 = vld [vmem:[#allocation4 + $0x1c] sm:$0xf]
    %v248 = vld [vmem:[#allocation4 + $0x20] sm:$0xf]
    %v249 = vld [vmem:[#allocation4 + $0x24] sm:$0xf]
    %v250 = vld [vmem:[#allocation4 + $0x28] sm:$0xf]
    %v251 = vld [vmem:[#allocation4 + $0x2c] sm:$0xf]
    %v252 = vld [vmem:[#allocation4 + $0x30] sm:$0xf]
    %v253 = vld [vmem:[#allocation4 + $0x34] sm:$0xf]
    %v254 = vld [vmem:[#allocation4 + $0x38] sm:$0xf]
    %v255 = vld [vmem:[#allocation4 + $0x3c] sm:$0xf]
    %v256 = vld [vmem:[%s6] sm:$0x1]
    %v258 = vlaneseq
    %v259 = vshrl.u32 %v258, 7
    %v260 = vsub.s32 0, %v259
    %v261 = vrot.slane %v256, %v260
    %v279 = vunpack.c.l.b16 %v240
    %v280 = vunpack.c.l.b16 %v241
    %v281 = vunpack.c.l.b16 %v242
    %v282 = vunpack.c.l.b16 %v243
    %v283 = vunpack.c.l.b16 %v244
    %v284 = vunpack.c.l.b16 %v245
    %v285 = vunpack.c.l.b16 %v246
    %v286 = vunpack.c.l.b16 %v247
    %v287 = vunpack.c.l.b16 %v248
    %v288 = vunpack.c.l.b16 %v249
    %v289 = vunpack.c.l.b16 %v250
    %v290 = vunpack.c.l.b16 %v251
    %v291 = vunpack.c.l.b16 %v252
    %v292 = vunpack.c.l.b16 %v253
    %v293 = vunpack.c.l.b16 %v254
    %v294 = vunpack.c.l.b16 %v255
    %v295 = vpack.c.b16 %v280, %v279
    %v296 = vpack.c.b16 %v282, %v281
    %v297 = vpack.c.b16 %v284, %v283
    %v298 = vpack.c.b16 %v286, %v285
    %v299 = vpack.c.b16 %v288, %v287
    %v300 = vpack.c.b16 %v290, %v289
    %v301 = vpack.c.b16 %v292, %v291
    %v302 = vpack.c.b16 %v294, %v293
    %311 = vmatprep.subr.bf16.mxu0 0
    %312 = vmatpush1.bf16.msra.mxu0 %v295
    %313 = vmatprep.subr.bf16.mxu0 0
    %314 = vmatpush1.bf16.msra.mxu0 %v296
    %315 = vmatprep.subr.bf16.mxu0 0
    %316 = vmatpush1.bf16.msra.mxu0 %v297
    %317 = vmatprep.subr.bf16.mxu0 0
    %318 = vmatpush1.bf16.msra.mxu0 %v298
    %319 = vmatprep.subr.bf16.mxu0 0
    %320 = vmatpush1.bf16.msra.mxu0 %v299
    %321 = vmatprep.subr.bf16.mxu0 0
    %322 = vmatpush1.bf16.msra.mxu0 %v300
    %323 = vmatprep.subr.bf16.mxu0 0
    %324 = vmatpush1.bf16.msra.mxu0 %v301
    %325 = vmatprep.subr.bf16.mxu0 0
    %326 = vmatpush1.bf16.msra.mxu0 %v302
    %327 = vmatprep.subr.bf16.mxu0 0
    %328 = vmatpush1.bf16.msra.mxu0 0
    %329 = vmatprep.subr.bf16.mxu0 0
    %330 = vmatpush1.bf16.msra.mxu0 0
    %331 = vmatprep.subr.bf16.mxu0 0
    %332 = vmatpush1.bf16.msra.mxu0 0
    %333 = vmatprep.subr.bf16.mxu0 0
    %334 = vmatpush1.bf16.msra.mxu0 0
    %335 = vmatprep.subr.bf16.mxu0 0
    %336 = vmatpush1.bf16.msra.mxu0 0
    %337 = vmatprep.subr.bf16.mxu0 0
    %338 = vmatpush1.bf16.msra.mxu0 0
    %339 = vmatprep.subr.bf16.mxu0 0
    %340 = vmatpush1.bf16.msra.mxu0 0
    %341 = vmatprep.subr.bf16.mxu0 0
    %342 = vmatpush1.bf16.msra.mxu0 0
    %343 = vmatprep.mubr.bf16.mxu0 0
    %344 = vmatmul.mubr.bf16.gmra.mrb[0].mxu0 %v239
    %v345 = vpop.f32.mrb[0].mxu0
    %v346 = vadd.f32 %v261, %v345
    %v347 = vpop.f32.mrb[0].mxu0
    %v348 = vpop.f32.mrb[0].mxu0
    %v349 = vadd.f32 %v261, %v348
    %v350 = vpop.f32.mrb[0].mxu0
    %351 = vdwg.mxu0
    %352 = vmax.xlane.f32.xlu0 %v346
    %v353 = vpop.xlane.xlu0 %352
    %354 = vmax.xlane.f32.xlu0 %v349
    %v355 = vpop.xlane.xlu0 %354
    %v356 = vsub.f32 %v346, %v353
    %v357 = vsub.f32 %v349, %v355
    %v358 = vmul.f32 %v356, 1.442695
    %v359 = vpow.pop %v358
    %v360 = vmul.f32 %v357, 1.442695
    %v361 = vpow.pop %v360
    %362 = vadd.xlane.f32.xlu0 %v359
    %v363 = vpop.xlane.xlu0 %362
    %364 = vadd.xlane.f32.xlu0 %v361
    %v365 = vpop.xlane.xlu0 %364
    %v366 = vrcp.pop %v363
    %v367 = vrcp.pop %v365
    %v368 = vmul.f32 %v359, %v366
    %v369 = vmul.f32 %v361, %v367
    %v370 = vpack.c.bf16 %v369, %v368
    %v372 = vunpack.c.l.b16 %v370
    %v373 = vunpack.c.h.b16 %v370
    %v374 = vpack.c.b16 %v372, %v372
    %v375 = vpack.c.b16 %v373, %v373
    %378 = vst [vmem:[%s7] sm:$0xf] %v374
    %379 = vst [vmem:[%s7 + $0x4] sm:$0xf] %v375
    // Predicated region
    $region38: #{policy_forward.1} parent=1 // pred_check
      _
    $region39: #{policy_forward.1} parent=1 // pred_check_branch
      %381 = sbr.rel (0) target = $region41
    $region40: #{policy_forward.1} parent=1 // pred_region
      _
    $region41: #{policy_forward.1} parent=1 // pred_fallthru
      _
    // Predicated region
    $region42: #{policy_forward.1} parent=1 // pred_check
      _
    $region43: #{policy_forward.1} parent=1 // pred_check_branch
      %383 = sbr.rel (0) target = $region45
    $region44: #{policy_forward.1} parent=1 // pred_region
      _
    $region45: #{policy_forward.1} parent=1 // pred_fallthru
      _
    %384 = vsyncpa [#allocation3], 1
    %385 = vsyncpa [#allocation5], 1

</llo_original>
